<compile_context>
chip_gen: v6e
topology: v6e:2x2x1
jax: 0.10.0
libtpu: 0.0.40
codegen_flags: <defaults>
</compile_context>

<pallas_src>
import functools

import jax
import jax.numpy as jnp
from jax.experimental import pallas as pl
from jax.experimental.pallas import tpu as pltpu


def _jsd_partial_kernel(text_ref, img_ref, out_ref, *, reduce_axis):
    """One tile: stable softmax along `reduce_axis`, fused symmetric-KL term,
    reduced along `reduce_axis` into the (tiny) output block."""
    t = text_ref[...].astype(jnp.float32)
    i = img_ref[...].astype(jnp.float32)

    # Numerically-stable softmax + log-softmax along the feature axis.
    t_max = jnp.max(t, axis=reduce_axis, keepdims=True)
    t_shift = t - t_max
    t_exp = jnp.exp(t_shift)
    t_sum = jnp.sum(t_exp, axis=reduce_axis, keepdims=True)
    log_pt = t_shift - jnp.log(t_sum)
    p_t = t_exp * pl.reciprocal(t_sum, approx=False)

    i_max = jnp.max(i, axis=reduce_axis, keepdims=True)
    i_shift = i - i_max
    i_exp = jnp.exp(i_shift)
    i_sum = jnp.sum(i_exp, axis=reduce_axis, keepdims=True)
    log_pi = i_shift - jnp.log(i_sum)
    p_i = i_exp * pl.reciprocal(i_sum, approx=False)

    m = 0.5 * (p_t + p_i)
    # Clamp so m == 0 would give 0 * finite instead of 0 * (-inf); matches
    # torch's xlogy handling and is a no-op for softmax outputs (> 0).
    log_m = jnp.log(jnp.maximum(m, jnp.float32(jnp.finfo(jnp.float32).tiny)))

    # Fused symmetric term: m*(log m - log p_t) + m*(log m - log p_i),
    # reduced along the feature axis -> per-row (or per-column) partial sum.
    term = m * (2.0 * log_m - log_pt - log_pi)
    out_ref[...] = jnp.sum(term, axis=reduce_axis, keepdims=True).astype(out_ref.dtype)


def _round_up(x, m):
    return ((x + m - 1) // m) * m


def _vmem_budget():
    """(vmem_limit_bytes, working_bytes) derived from the actual TPU generation."""
    try:
        cap = int(pltpu.get_tpu_info().vmem_capacity_bytes)
    except Exception:
        cap = 0
    if cap <= 0:
        cap = 64 * 1024 * 1024                       # conservative: v7x per-TC VMEM
    limit = min(int(cap * 0.72), cap - (16 << 20))   # ~46 MiB on v7x, ~92 MiB on v5e/v6e
    limit = max(limit, 32 * 1024 * 1024)
    return limit, limit - (4 << 20)


def _is_multi_tensorcore():
    """True for parts with >1 TensorCore behind one Pallas device (v7x)."""
    try:
        kind = jax.devices()[0].device_kind.lower()
    except Exception:
        return False
    return "v7" in kind or "7x" in kind


def _pick_batch_tile(B, d_cost, itemsize, align, budget, hard_cap):
    """Largest `align`-aligned batch tile whose double-buffered working set fits
    `budget`. Only the two inputs' DMA double-buffers (plus a tiny padded
    output block) live in VMEM; compute temporaries live in vregs."""
    per_unit = 4 * d_cost * itemsize + 1024   # 2 inputs x 2 buffers + padded out block
    cap = budget // max(per_unit, 1)
    cap = max(align, (cap // align) * align)
    cap = min(cap, hard_cap)                  # 512-1024 rows is the sweet spot
    tile = min(cap, _round_up(B, align))
    return max(align, (tile // align) * align)
    # TODO(synk): also tile the feature dim for D so large that even a single
    # `align`-row tile overflows the VMEM budget.


def symmetric_consistency_loss(text_features, image_features, distribution=None,
                               *, batch_tile=None, working_vmem_bytes=None):
    """Pallas TPU implementation of SymmetricConsistencyLoss.forward.

    text_features, image_features: (B, D) arrays (f32 or bf16). `distribution`
    is accepted for signature parity but unused (as in the PyTorch forward).
    """
    del distribution  # unused by the reference module's forward
    B, D = text_features.shape
    assert image_features.shape == (B, D)

    itemsize = jnp.dtype(text_features.dtype).itemsize
    pack = {4: 8, 2: 16, 1: 32}.get(itemsize, 8)     # sublane packing for the dtype

    vmem_limit, working = _vmem_budget()
    if working_vmem_bytes is not None:               # caller may shrink, never exceed
        working = max(1 << 20, min(int(working_vmem_bytes), working))

    # Small feature dims waste 128-lane vregs if D sits on the lane axis; put
    # the batch on lanes instead (softmax then reduces along sublanes).
    transposed = D < 128
    if transposed:
        align, hard_cap, reduce_axis = 128, 8192, 0
        d_cost = _round_up(D, pack)                  # D pads along sublanes
    else:
        align, hard_cap, reduce_axis = pack, 1024, 1
        d_cost = _round_up(D, 128)                   # D pads along lanes

    if batch_tile is not None:
        tile = max(align, min(_round_up(int(batch_tile), align), _round_up(B, align)))
    else:
        tile = _pick_batch_tile(B, d_cost, itemsize, align, working, hard_cap)

    steps = -(-B // tile)
    num_cores = 2 if (_is_multi_tensorcore() and steps >= 2) else 1
    if steps % num_cores:
        steps += 1                                   # keep both v7x TCs busy
    spc = steps // num_cores                         # grid steps per core
    Bp = steps * tile

    tf, imf = text_features, image_features
    if Bp != B:
        # Identical zero rows in both inputs -> identical uniform softmaxes ->
        # well-defined finite partials, which are discarded below anyway.
        padding = ((0, Bp - B), (0, 0))
        tf = jnp.pad(tf, padding)
        imf = jnp.pad(imf, padding)

    if transposed:
        tf, imf = tf.T, imf.T                        # (D, Bp): batch on the lane axis
        # TODO(synk): fold this transpose into the kernel (segmented in-lane
        # softmax) to avoid the extra HBM pass for very large small-D batches.
        block = (D, tile)
        out_block = (1, tile)
        out_shape = jax.ShapeDtypeStruct((1, Bp), jnp.float32)
        index_map = lambda c, b: (0, c * spc + b)
    else:
        block = (tile, D)
        out_block = (tile, 1)
        out_shape = jax.ShapeDtypeStruct((Bp, 1), jnp.float32)
        index_map = lambda c, b: (c * spc + b, 0)

    if num_cores == 2:
        dims = (pltpu.CORE_PARALLEL, pltpu.ARBITRARY)   # shard across v7x's 2 TCs
    else:
        dims = ("parallel", "parallel")                 # every step is independent

    kernel = functools.partial(_jsd_partial_kernel, reduce_axis=reduce_axis)

    partials = pl.pallas_call(
        kernel,
        out_shape=out_shape,
        grid_spec=pltpu.PrefetchScalarGridSpec(
            num_scalar_prefetch=0,
            grid=(num_cores, spc),
            in_specs=[pl.BlockSpec(block, index_map),
                      pl.BlockSpec(block, index_map)],
            out_specs=pl.BlockSpec(out_block, index_map),
        ),
        compiler_params=pltpu.CompilerParams(
            dimension_semantics=dims,
            vmem_limit_bytes=vmem_limit,
        ),
    )(tf, imf)

    # Drop the padded rows/columns, then finish the reduction (tiny XLA sum).
    valid = partials[:, :B] if transposed else partials[:B, :]
    return 0.5 * jnp.sum(valid) / jnp.float32(B)


def _reference_jsd(text_features, image_features):
    p_t = jax.nn.softmax(text_features.astype(jnp.float32), axis=-1)
    p_i = jax.nn.softmax(image_features.astype(jnp.float32), axis=-1)
    m = 0.5 * (p_t + p_i)
    B = text_features.shape[0]
    kl_t = jnp.sum(m * (jnp.log(m) - jnp.log(p_t))) / B
    kl_i = jnp.sum(m * (jnp.log(m) - jnp.log(p_i))) / B
    return 0.5 * (kl_t + kl_i)


if __name__ == "__main__":
    key = jax.random.PRNGKey(0)
    k_text, k_img, k_dist = jax.random.split(key, 3)

    # Small shapes consistent with the module: batch=16, feature dim=32.
    B, D = 16, 32
    text_features = jax.random.normal(k_text, (B, D), dtype=jnp.float32)
    image_features = jax.random.normal(k_img, (B, D), dtype=jnp.float32)
    distribution = jax.random.normal(k_dist, (B, D), dtype=jnp.float32)  # unused by forward

    loss = jax.block_until_ready(
        symmetric_consistency_loss(text_features, image_features, distribution))
    ref = jax.block_until_ready(_reference_jsd(text_features, image_features))
    assert jnp.allclose(loss, ref, rtol=2e-5, atol=1e-5), (loss, ref)

    # Also exercise the wide-feature (row-layout) path with a non-aligned batch.
    B2, D2 = 10, 256
    t2 = jax.random.normal(jax.random.PRNGKey(1), (B2, D2), dtype=jnp.float32)
    i2 = jax.random.normal(jax.random.PRNGKey(2), (B2, D2), dtype=jnp.float32)
    loss2 = jax.block_until_ready(symmetric_consistency_loss(t2, i2, None))
    ref2 = jax.block_until_ready(_reference_jsd(t2, i2))
    assert jnp.allclose(loss2, ref2, rtol=2e-5, atol=1e-5), (loss2, ref2)

    print("KERNEL_OK")
</pallas_src>

<mosaic_0001>
module attributes {stable_mosaic.version = 11 : i64} {
  func.func @_jsd_partial_kernel(%arg0: i32, %arg1: i32, %arg2: memref<32x128xf32, #tpu.memory_space<vmem>>, %arg3: memref<32x128xf32, #tpu.memory_space<vmem>>, %arg4: memref<1x128xf32, #tpu.memory_space<vmem>>) attributes {dimension_semantics = [#tpu.dimension_semantics<parallel>, #tpu.dimension_semantics<parallel>], iteration_bounds = array<i64: 1, 1>, scalar_prefetch = 0 : i64, scratch_operands = 0 : i64, tpu.core_type = #tpu.core_type<tc>, window_params = [{transform_indices = @transform_0, window_bounds = array<i64: 32, 128>}, {transform_indices = @transform_1, window_bounds = array<i64: 32, 128>}, {transform_indices = @transform_2, window_bounds = array<i64: 1, 128>}]} {
    %c0 = arith.constant 0 : index
    %c0_0 = arith.constant 0 : index
    %0 = vector.load %arg2[%c0, %c0_0] : memref<32x128xf32, #tpu.memory_space<vmem>>, vector<32x128xf32>
    %c0_1 = arith.constant 0 : index
    %c0_2 = arith.constant 0 : index
    %1 = vector.load %arg3[%c0_1, %c0_2] : memref<32x128xf32, #tpu.memory_space<vmem>>, vector<32x128xf32>
    %cst = arith.constant dense<0xFF800000> : vector<128xf32>
    %2 = vector.multi_reduction <maximumf>, %0, %cst [0] : vector<32x128xf32> to vector<128xf32>
    %3 = vector.shape_cast %2 : vector<128xf32> to vector<1x128xf32>
    %4 = vector.broadcast %3 : vector<1x128xf32> to vector<32x128xf32>
    %5 = arith.subf %0, %4 : vector<32x128xf32>
    %6 = math.exp %5 : vector<32x128xf32>
    %cst_3 = arith.constant dense<0.000000e+00> : vector<128xf32>
    %7 = vector.multi_reduction <add>, %6, %cst_3 [0] : vector<32x128xf32> to vector<128xf32>
    %8 = vector.shape_cast %7 : vector<128xf32> to vector<1x128xf32>
    %9 = math.log %8 : vector<1x128xf32>
    %10 = vector.broadcast %9 : vector<1x128xf32> to vector<32x128xf32>
    %11 = arith.subf %5, %10 : vector<32x128xf32>
    %12 = tpu.reciprocal %8 : vector<1x128xf32> -> vector<1x128xf32>
    %13 = vector.broadcast %12 : vector<1x128xf32> to vector<32x128xf32>
    %14 = arith.mulf %6, %13 : vector<32x128xf32>
    %cst_4 = arith.constant dense<0xFF800000> : vector<128xf32>
    %15 = vector.multi_reduction <maximumf>, %1, %cst_4 [0] : vector<32x128xf32> to vector<128xf32>
    %16 = vector.shape_cast %15 : vector<128xf32> to vector<1x128xf32>
    %17 = vector.broadcast %16 : vector<1x128xf32> to vector<32x128xf32>
    %18 = arith.subf %1, %17 : vector<32x128xf32>
    %19 = math.exp %18 : vector<32x128xf32>
    %cst_5 = arith.constant dense<0.000000e+00> : vector<128xf32>
    %20 = vector.multi_reduction <add>, %19, %cst_5 [0] : vector<32x128xf32> to vector<128xf32>
    %21 = vector.shape_cast %20 : vector<128xf32> to vector<1x128xf32>
    %22 = math.log %21 : vector<1x128xf32>
    %23 = vector.broadcast %22 : vector<1x128xf32> to vector<32x128xf32>
    %24 = arith.subf %18, %23 : vector<32x128xf32>
    %25 = tpu.reciprocal %21 : vector<1x128xf32> -> vector<1x128xf32>
    %26 = vector.broadcast %25 : vector<1x128xf32> to vector<32x128xf32>
    %27 = arith.mulf %19, %26 : vector<32x128xf32>
    %28 = arith.addf %14, %27 : vector<32x128xf32>
    %cst_6 = arith.constant 5.000000e-01 : f32
    %29 = vector.broadcast %cst_6 : f32 to vector<32x128xf32>
    %30 = arith.mulf %29, %28 : vector<32x128xf32>
    %cst_7 = arith.constant 1.17549435E-38 : f32
    %31 = vector.broadcast %cst_7 : f32 to vector<32x128xf32>
    %32 = arith.maximumf %30, %31 : vector<32x128xf32>
    %33 = math.log %32 : vector<32x128xf32>
    %cst_8 = arith.constant 2.000000e+00 : f32
    %34 = vector.broadcast %cst_8 : f32 to vector<32x128xf32>
    %35 = arith.mulf %34, %33 : vector<32x128xf32>
    %36 = arith.subf %35, %11 : vector<32x128xf32>
    %37 = arith.subf %36, %24 : vector<32x128xf32>
    %38 = arith.mulf %30, %37 : vector<32x128xf32>
    %cst_9 = arith.constant dense<0.000000e+00> : vector<128xf32>
    %39 = vector.multi_reduction <add>, %38, %cst_9 [0] : vector<32x128xf32> to vector<128xf32>
    %40 = vector.shape_cast %39 : vector<128xf32> to vector<1x128xf32>
    %c0_10 = arith.constant 0 : index
    %c0_11 = arith.constant 0 : index
    %41 = vector.load %arg4[%c0_10, %c0_11] : memref<1x128xf32, #tpu.memory_space<vmem>>, vector<1x128xf32>
    tpu.vector_store %arg4[%c0_10, %c0_11], %40 {strides = array<i32>} : memref<1x128xf32, #tpu.memory_space<vmem>>, vector<1x128xf32>,
    return
  }
  func.func @transform_0(%arg0: i32, %arg1: i32) -> (i32, i32) {
    %c1_i32 = arith.constant 1 : i32
    %0 = arith.muli %arg0, %c1_i32 : i32
    %1 = arith.addi %0, %arg1 : i32
    %c0_i32 = arith.constant 0 : i32
    %c0_i32_0 = arith.constant 0 : i32
    return %c0_i32, %1 : i32, i32
  }
  func.func @transform_1(%arg0: i32, %arg1: i32) -> (i32, i32) {
    %c1_i32 = arith.constant 1 : i32
    %0 = arith.muli %arg0, %c1_i32 : i32
    %1 = arith.addi %0, %arg1 : i32
    %c0_i32 = arith.constant 0 : i32
    %c0_i32_0 = arith.constant 0 : i32
    return %c0_i32, %1 : i32, i32
  }
  func.func @transform_2(%arg0: i32, %arg1: i32) -> (i32, i32) {
    %c1_i32 = arith.constant 1 : i32
    %0 = arith.muli %arg0, %c1_i32 : i32
    %1 = arith.addi %0, %arg1 : i32
    %c0_i32 = arith.constant 0 : i32
    %c0_i32_0 = arith.constant 0 : i32
    return %c0_i32, %1 : i32, i32
  }
}

</mosaic_0001>

<llo_original>
// kernel: tpu_custom_call.1
$region0: #{tpu_custom_call.1}
  #allocation0 [shape = 'u32[]', space=smem, size = 0x4, offset = 0x4, fixed_abs, tag = 'smem constant byte address 0x4 - core index']
  #allocation1 [shape = 'u32[144,128]{1,0:T(1,128)}', space=vmem, size = 0x12000, scoped, tag = 'internal scratch']
  %s0 = inlined_call_operand.hbm [shape: f32[32,128], index: 0, kind: input, shape index: {}]
  %s1 = inlined_call_operand.hbm [shape: f32[32,128], index: 1, kind: input, shape index: {}]
  %s2 = inlined_call_operand.hbm [shape: f32[1,128], index: 2, kind: output, shape index: {}]
  %s3 = sld [smem:[#allocation0]]
  $region26: #{tpu_custom_call.1} parent=0
    _
  %s5 = ssub.s32 1, %s3
  %s6 = scalar_select 0, %s5, %s3
  $region1: #{tpu_custom_call.1} parent=0
    #allocation2 [shape = 'u8[16384]{0}', space=vmem, size = 0x4000, scoped, tag = 'input window, operand 0, single buffered']
    #allocation3 [shape = 's32[1]{0}', space=sflag, size = 0x4, scoped, tag = 'scoped memory for tpu_custom_call.1']
    #allocation4 [shape = 's32[1]{0}', space=sflag, size = 0x4, scoped, tag = 'scoped memory for tpu_custom_call.1']
    #allocation5 [shape = 'u8[16384]{0}', space=vmem, size = 0x4000, scoped, tag = 'input window, operand 1, single buffered']
    #allocation6 [shape = 's32[1]{0}', space=sflag, size = 0x4, scoped, tag = 'scoped memory for tpu_custom_call.1']
    #allocation7 [shape = 'u8[512]{0}', space=vmem, size = 0x400, scoped, tag = 'output window, operand 0, single buffered']
    %7 = vsyncpa [#allocation3], 0
    %8 = vsyncpa [#allocation6], 0
    %9 = vsyncpa [#allocation4], 0
    // Predicated region
    $region2: #{tpu_custom_call.1} parent=1 // pred_check
      _
    $region3: #{tpu_custom_call.1} parent=1 // pred_check_branch
      %11 = sbr.rel (0) target = $region5
    $region4: #{tpu_custom_call.1} parent=1 // pred_region
      %s12 = sadd.s32 0, 0
      %s14 = ssub.s32 512, 512
      %15 = vsyncadd [#allocation3], %s14
      %s16 = smul.addr %s12, 128
      %s17 = scalar_lea.hbm %s0, %s16
      %s18 = sshll.u32 [#allocation2], 4
      %s19 = int_to_ptr.vmem [resolvable:$true] %s18
      %24 = dma.hbm_to_vmem [thread:$0]  %s17, 512, %s19, [#allocation3], 128, 128, 8
    $region5: #{tpu_custom_call.1} parent=1 // pred_fallthru
      _
    // Predicated region
    $region6: #{tpu_custom_call.1} parent=1 // pred_check
      _
    $region7: #{tpu_custom_call.1} parent=1 // pred_check_branch
      %26 = sbr.rel (0) target = $region9
    $region8: #{tpu_custom_call.1} parent=1 // pred_region
      %s27 = sadd.s32 0, 0
      %s29 = ssub.s32 512, 512
      %30 = vsyncadd [#allocation6], %s29
      %s31 = smul.addr %s27, 128
      %s32 = scalar_lea.hbm %s1, %s31
      %s33 = sshll.u32 [#allocation5], 4
      %s34 = int_to_ptr.vmem [resolvable:$true] %s33
      %39 = dma.hbm_to_vmem [thread:$0]  %s32, 512, %s34, [#allocation6], 128, 128, 8
    $region9: #{tpu_custom_call.1} parent=1 // pred_fallthru
      _
    // Predicated region
    $region10: #{tpu_custom_call.1} parent=1 // pred_check
      _
    $region11: #{tpu_custom_call.1} parent=1 // pred_check_branch
      %41 = sbr.rel (0) target = $region13
    $region12: #{tpu_custom_call.1} parent=1 // pred_region
      %42 = dma.done [#allocation3], 512
    $region13: #{tpu_custom_call.1} parent=1 // pred_fallthru
      _
    // Predicated region
    $region14: #{tpu_custom_call.1} parent=1 // pred_check
      _
    $region15: #{tpu_custom_call.1} parent=1 // pred_check_branch
      %44 = sbr.rel (0) target = $region17
    $region16: #{tpu_custom_call.1} parent=1 // pred_region
      %45 = dma.done [#allocation6], 512
    $region17: #{tpu_custom_call.1} parent=1 // pred_fallthru
      _
    %s46 = sadd.s32 0, 0
    %s47 = sadd.s32 0, 0
    %s48 = sadd.s32 0, 0
    %v49 = vld [vmem:[#allocation2] sm:$0xff]
    %v50 = vld [vmem:[#allocation2 + $0x8] sm:$0xff]
    %v51 = vld [vmem:[#allocation2 + $0x10] sm:$0xff]
    %v52 = vld [vmem:[#allocation2 + $0x18] sm:$0xff]
    %v53 = vld [vmem:[#allocation5] sm:$0xff]
    %v54 = vld [vmem:[#allocation5 + $0x8] sm:$0xff]
    %v55 = vld [vmem:[#allocation5 + $0x10] sm:$0xff]
    %v56 = vld [vmem:[#allocation5 + $0x18] sm:$0xff]
    %v57 = vmax.f32 %v49, %v50
    %v58 = vmax.f32 %v51, %v52
    %v59 = vmax.f32 %v57, %v58
    %v60 = vrot.slane %v59, 4
    %v61 = vmax.f32 %v59, %v60
    %v62 = vrot.slane %v61, 2
    %v63 = vmax.f32 %v61, %v62
    %v64 = vrot.slane %v63, 1
    %v65 = vmax.f32 %v63, %v64
    %v66 = vsub.f32 %v49, %v65
    %v67 = vsub.f32 %v50, %v65
    %v68 = vsub.f32 %v51, %v65
    %v69 = vsub.f32 %v52, %v65
    %v70 = vmul.f32 %v66, 1.442695
    %v71 = vpow.pop %v70
    %v72 = vmul.f32 %v67, 1.442695
    %v73 = vpow.pop %v72
    %v74 = vmul.f32 %v68, 1.442695
    %v75 = vpow.pop %v74
    %v76 = vmul.f32 %v69, 1.442695
    %v77 = vpow.pop %v76
    %v78 = vadd.f32 %v71, %v73
    %v79 = vadd.f32 %v78, %v75
    %v80 = vadd.f32 %v79, %v77
    %v81 = vrot.slane %v80, 4
    %v82 = vadd.f32 %v80, %v81
    %v83 = vrot.slane %v82, 2
    %v84 = vadd.f32 %v82, %v83
    %v85 = vrot.slane %v84, 1
    %v86 = vadd.f32 %v84, %v85
    %v87 = vlog2.pop %v86
    %v88 = vmul.f32 %v87, 0.6931472
    %v89 = vsub.f32 %v66, %v88
    %v90 = vsub.f32 %v67, %v88
    %v91 = vsub.f32 %v68, %v88
    %v92 = vsub.f32 %v69, %v88
    %v93 = vrcp.pop %v86
    %v94 = vmul.f32 %v71, %v93
    %v95 = vmul.f32 %v73, %v93
    %v96 = vmul.f32 %v75, %v93
    %v97 = vmul.f32 %v77, %v93
    %v98 = vmax.f32 %v53, %v54
    %v99 = vmax.f32 %v55, %v56
    %v100 = vmax.f32 %v98, %v99
    %v101 = vrot.slane %v100, 4
    %v102 = vmax.f32 %v100, %v101
    %v103 = vrot.slane %v102, 2
    %v104 = vmax.f32 %v102, %v103
    %v105 = vrot.slane %v104, 1
    %v106 = vmax.f32 %v104, %v105
    %v107 = vsub.f32 %v53, %v106
    %v108 = vsub.f32 %v54, %v106
    %v109 = vsub.f32 %v55, %v106
    %v110 = vsub.f32 %v56, %v106
    %v111 = vmul.f32 %v107, 1.442695
    %v112 = vpow.pop %v111
    %v113 = vmul.f32 %v108, 1.442695
    %v114 = vpow.pop %v113
    %v115 = vmul.f32 %v109, 1.442695
    %v116 = vpow.pop %v115
    %v117 = vmul.f32 %v110, 1.442695
    %v118 = vpow.pop %v117
    %v119 = vadd.f32 %v112, %v114
    %v120 = vadd.f32 %v119, %v116
    %v121 = vadd.f32 %v120, %v118
    %v122 = vrot.slane %v121, 4
    %v123 = vadd.f32 %v121, %v122
    %v124 = vrot.slane %v123, 2
    %v125 = vadd.f32 %v123, %v124
    %v126 = vrot.slane %v125, 1
    %v127 = vadd.f32 %v125, %v126
    %v128 = vlog2.pop %v127
    %v129 = vmul.f32 %v128, 0.6931472
    %v130 = vsub.f32 %v107, %v129
    %v131 = vsub.f32 %v108, %v129
    %v132 = vsub.f32 %v109, %v129
    %v133 = vsub.f32 %v110, %v129
    %v134 = vrcp.pop %v127
    %v135 = vmul.f32 %v112, %v134
    %v136 = vmul.f32 %v114, %v134
    %v137 = vmul.f32 %v116, %v134
    %v138 = vmul.f32 %v118, %v134
    %v139 = vadd.f32 %v94, %v135
    %v140 = vadd.f32 %v95, %v136
    %v141 = vadd.f32 %v96, %v137
    %v142 = vadd.f32 %v97, %v138
    %v143 = vmul.f32 %v139, 0.5
    %v144 = vmul.f32 %v140, 0.5
    %v145 = vmul.f32 %v141, 0.5
    %v146 = vmul.f32 %v142, 0.5
    %v147 = vmax.f32 %v143, 1.1754944e-38
    %v148 = vmax.f32 %v144, 1.1754944e-38
    %v149 = vmax.f32 %v145, 1.1754944e-38
    %v150 = vmax.f32 %v146, 1.1754944e-38
    %v151 = vlog2.pop %v147
    %v152 = vmul.f32 %v151, 0.6931472
    %v153 = vlog2.pop %v148
    %v154 = vmul.f32 %v153, 0.6931472
    %v155 = vlog2.pop %v149
    %v156 = vmul.f32 %v155, 0.6931472
    %v157 = vlog2.pop %v150
    %v158 = vmul.f32 %v157, 0.6931472
    %v159 = vmul.f32 %v152, 2.0
    %v160 = vmul.f32 %v154, 2.0
    %v161 = vmul.f32 %v156, 2.0
    %v162 = vmul.f32 %v158, 2.0
    %v163 = vsub.f32 %v159, %v89
    %v164 = vsub.f32 %v160, %v90
    %v165 = vsub.f32 %v161, %v91
    %v166 = vsub.f32 %v162, %v92
    %v167 = vsub.f32 %v163, %v130
    %v168 = vsub.f32 %v164, %v131
    %v169 = vsub.f32 %v165, %v132
    %v170 = vsub.f32 %v166, %v133
    %v171 = vmul.f32 %v143, %v167
    %v172 = vmul.f32 %v144, %v168
    %v173 = vmul.f32 %v145, %v169
    %v174 = vmul.f32 %v146, %v170
    %v175 = vadd.f32 %v171, %v172
    %v176 = vadd.f32 %v175, %v173
    %v177 = vadd.f32 %v176, %v174
    %v178 = vrot.slane %v177, 4
    %v179 = vadd.f32 %v177, %v178
    %v180 = vrot.slane %v179, 2
    %v181 = vadd.f32 %v179, %v180
    %v182 = vrot.slane %v181, 1
    %v183 = vadd.f32 %v181, %v182
    %184 = vst [vmem:[#allocation7] sm:$0x1] %v183
    // Predicated region
    $region18: #{tpu_custom_call.1} parent=1 // pred_check
      _
    $region19: #{tpu_custom_call.1} parent=1 // pred_check_branch
      %186 = sbr.rel (0) target = $region21
    $region20: #{tpu_custom_call.1} parent=1 // pred_region
      %s187 = sadd.s32 0, 0
      %s189 = ssub.s32 16, 16
      %190 = vsyncadd [#allocation4], %s189
      %s191 = smul.addr %s187, 16
      %s192 = scalar_lea.hbm %s2, %s191
      %s194 = sshll.u32 [#allocation7], 4
      %s195 = int_to_ptr.vmem [resolvable:$true] %s194
      %197 = dma.vmem_to_hbm [thread:$0]  %s195, 16, %s192, [#allocation4]
    $region21: #{tpu_custom_call.1} parent=1 // pred_fallthru
      _
    // Predicated region
    $region22: #{tpu_custom_call.1} parent=1 // pred_check
      _
    $region23: #{tpu_custom_call.1} parent=1 // pred_check_branch
      %199 = sbr.rel (0) target = $region25
    $region24: #{tpu_custom_call.1} parent=1 // pred_region
      %200 = dma.done [#allocation4], 16
    $region25: #{tpu_custom_call.1} parent=1 // pred_fallthru
      _
    %201 = vsyncpa [#allocation3], 1
    %202 = vsyncpa [#allocation6], 1
    %203 = vsyncpa [#allocation4], 1

</llo_original>
